<compile_context>
chip_gen: v7x
topology: tpu7x:2x2x1
jax: 0.10.0
libtpu: 0.0.40
codegen_flags: <defaults>
</compile_context>

<pallas_src>
import functools

import jax
import jax.numpy as jnp
from jax.experimental import pallas as pl
from jax.experimental.pallas import tpu as pltpu


def _round_up(x, m):
    return (x + m - 1) // m * m


def _lane_pad(n):
    return _round_up(max(int(n), 1), 128)


def _vmem_params():
    """(tile VMEM budget, vmem_limit_bytes, min grid steps) per TPU generation."""
    try:
        phys = pltpu.get_tpu_info().vmem_capacity_bytes
    except Exception:  # conservative default if the query is unavailable
        phys = 64 * 1024 * 1024
    if phys >= 96 * 1024 * 1024:
        # v5e / v6e: 128 MiB physical VMEM -> big tiles, raised scoped limit.
        return 48 * 1024 * 1024, 100 * 1024 * 1024, 2
    # v7x-class: 64 MiB physical, ~3.2 TB/s HBM -> keep blocks <= ~20 MiB and
    # aim for >= 4 grid steps so both TensorCores get pipelined work.
    return 20 * 1024 * 1024, 48 * 1024 * 1024, 4


def _choose_batch_tile(batch, n_bodies, feat, x_itemsize, m_itemsize, mask_expanded):
    """Pick TB = batches per grid step from the padded, dtype-aware VMEM footprint."""
    flat = n_bodies * feat
    budget, vmem_limit, min_steps = _vmem_params()
    mask_cols = flat if mask_expanded else n_bodies
    per_row = (
        2 * 2 * _lane_pad(flat) * x_itemsize        # input + target blocks, double-buffered
        + 2 * _lane_pad(mask_cols) * m_itemsize     # mask block, double-buffered
        + 2 * _lane_pad(1) * 4                      # (tb, 1) output block
        + 3 * _lane_pad(flat) * 4                   # f32 in-kernel temporaries (diff^2, w, ...)
    )
    fixed = 0 if mask_expanded else n_bodies * _lane_pad(flat) * 4   # expansion matrix
    cap = max(1, (budget - fixed) // per_row)
    if batch >= min_steps:
        cap = min(cap, max(1, batch // min_steps))   # keep the pipeline / both cores busy
    tb = min(cap, batch)
    if tb < batch:
        # Second-minor block dim must be a multiple of 8 (or the full dim).
        tb = max(8, (tb // 8) * 8)
        if tb >= batch:
            tb = batch
        else:
            # Prefer an exact divisor within 2x (avoids a ragged last block);
            # otherwise keep tb and let the cdiv grid handle the tail.
            for cand in range(tb, max(8, tb // 2) - 1, -8):
                if batch % cand == 0:
                    tb = cand
                    break
    return tb, vmem_limit


def _rmse_kernel(x_ref, y_ref, m_ref, o_ref, *, n_bodies, feat, mask_expanded):
    # x_ref, y_ref: (TB, F) lane-dense VMEM; m_ref: (TB, N) or (TB, F); o_ref: (TB, 1).
    x = x_ref[...].astype(jnp.float32)
    y = y_ref[...].astype(jnp.float32)
    diff = x - y
    d2 = diff * diff                                           # (TB, F)
    m = m_ref[...].astype(jnp.float32)

    if mask_expanded:
        w = m                                                  # (TB, F), already expanded
        count = jnp.sum(w, axis=-1, keepdims=True)             # (TB, 1)
    else:
        flat = n_bodies * feat
        # 0/1 expansion matrix E[n, i] = 1 iff n*feat <= i < (n+1)*feat, so
        # (m @ E)[b, n*feat + d] == m[b, n].  Runs on the otherwise-idle MXU,
        # needs no value relayout and no extra HBM traffic; exact for 0/1 masks.
        n_idx = jax.lax.broadcasted_iota(jnp.int32, (n_bodies, flat), 0)
        i_idx = jax.lax.broadcasted_iota(jnp.int32, (n_bodies, flat), 1)
        lo = n_idx * feat
        e = jnp.where((i_idx >= lo) & (i_idx < lo + feat), 1.0, 0.0).astype(jnp.float32)
        w = jnp.dot(m, e, preferred_element_type=jnp.float32)  # (TB, F)
        # mask is constant over the feature dim -> count = D * sum(mask).
        count = jnp.sum(m, axis=-1, keepdims=True) * jnp.float32(feat)

    sum_mse = jnp.sum(d2 * w, axis=-1, keepdims=True)          # (TB, 1), VPU/XLU in f32
    # NOTE: like the PyTorch module, an all-zero mask row yields 0/0 -> NaN.
    o_ref[...] = jnp.sqrt(sum_mse / count)


def root_mean_squared_error(inp, target, dynamic_mask, *, batch_tile=None):
    """Per-batch masked RMSE, identical to the PyTorch module's forward."""
    B, N, D = inp.shape
    assert target.shape == (B, N, D)
    assert dynamic_mask.shape == (B, N, 1)
    F = N * D

    # In-kernel mask expansion uses an (N, F) 0/1 matrix; keep it <= 2 MiB
    # (within that bound the extra MXU flops stay well under the HBM roofline).
    # Beyond that, pre-expand the mask in the wrapper (extra HBM bytes, but robust).
    mask_expanded = (N * F * 4) > (2 * 1024 * 1024)

    x2 = inp.reshape(B, F)                       # free: contiguous reshape
    y2 = target.reshape(B, F)
    if mask_expanded:
        m2 = jnp.broadcast_to(dynamic_mask, (B, N, D)).reshape(B, F)
    else:
        m2 = dynamic_mask.reshape(B, N)          # free: squeeze trailing 1

    tb, vmem_limit = _choose_batch_tile(
        B, N, D, inp.dtype.itemsize, m2.dtype.itemsize, mask_expanded)
    if batch_tile is not None:
        tb = batch_tile
    grid = (pl.cdiv(B, tb),)
    mask_cols = F if mask_expanded else N

    kernel = functools.partial(
        _rmse_kernel, n_bodies=N, feat=D, mask_expanded=mask_expanded)

    out = pl.pallas_call(
        kernel,
        out_shape=jax.ShapeDtypeStruct((B, 1), jnp.float32),
        grid_spec=pltpu.PrefetchScalarGridSpec(
            num_scalar_prefetch=0,
            grid=grid,
            in_specs=[
                pl.BlockSpec((tb, F), lambda b: (b, 0)),
                pl.BlockSpec((tb, F), lambda b: (b, 0)),
                pl.BlockSpec((tb, mask_cols), lambda b: (b, 0)),
            ],
            out_specs=pl.BlockSpec((tb, 1), lambda b: (b, 0)),
        ),
        compiler_params=pltpu.CompilerParams(
            dimension_semantics=("parallel",),
            vmem_limit_bytes=vmem_limit,
        ),
    )(x2, y2, m2)
    return out.reshape(B)


def _reference(inp, target, dynamic_mask):
    mse = (inp - target) ** 2
    mask = jnp.broadcast_to(dynamic_mask, mse.shape)
    masked = mse * mask
    sum_mse = masked.reshape(masked.shape[0], -1).sum(axis=1)
    count = mask.reshape(mask.shape[0], -1).sum(axis=1)
    return jnp.sqrt(sum_mse / count)


if __name__ == "__main__":
    B, N, D = 24, 16, 32
    key = jax.random.PRNGKey(0)
    k1, k2, k3 = jax.random.split(key, 3)

    inp = jax.random.normal(k1, (B, N, D), dtype=jnp.float32)
    target = jax.random.normal(k2, (B, N, D), dtype=jnp.float32)
    mask = jax.random.bernoulli(k3, 0.5, (B, N, 1)).astype(jnp.float32)
    # Guarantee a nonzero count per batch (as the torch module implicitly assumes).
    mask = mask.at[:, 0, 0].set(1.0)

    rmse = root_mean_squared_error(inp, target, mask)
    jax.block_until_ready(rmse)

    ref = _reference(inp, target, mask)
    assert rmse.shape == (B,)
    assert jnp.allclose(rmse, ref, rtol=1e-5, atol=1e-5), (rmse, ref)

    print("KERNEL_OK")
</pallas_src>

<mosaic_0001>
module attributes {stable_mosaic.version = 11 : i64} {
  func.func @_rmse_kernel(%arg0: i32, %arg1: memref<8x512xf32, #tpu.memory_space<vmem>>, %arg2: memref<8x512xf32, #tpu.memory_space<vmem>>, %arg3: memref<8x16xf32, #tpu.memory_space<vmem>>, %arg4: memref<8x1xf32, #tpu.memory_space<vmem>>) attributes {dimension_semantics = [#tpu.dimension_semantics<parallel>], iteration_bounds = array<i64: 3>, scalar_prefetch = 0 : i64, scratch_operands = 0 : i64, tpu.core_type = #tpu.core_type<tc>, window_params = [{transform_indices = @transform_0, window_bounds = array<i64: 8, 512>}, {transform_indices = @transform_1, window_bounds = array<i64: 8, 512>}, {transform_indices = @transform_2, window_bounds = array<i64: 8, 16>}, {transform_indices = @transform_3, window_bounds = array<i64: 8, 1>}]} {
    %c0 = arith.constant 0 : index
    %c0_0 = arith.constant 0 : index
    %0 = vector.load %arg1[%c0, %c0_0] : memref<8x512xf32, #tpu.memory_space<vmem>>, vector<8x512xf32>
    %c0_1 = arith.constant 0 : index
    %c0_2 = arith.constant 0 : index
    %1 = vector.load %arg2[%c0_1, %c0_2] : memref<8x512xf32, #tpu.memory_space<vmem>>, vector<8x512xf32>
    %2 = arith.subf %0, %1 : vector<8x512xf32>
    %3 = arith.mulf %2, %2 : vector<8x512xf32>
    %c0_3 = arith.constant 0 : index
    %c0_4 = arith.constant 0 : index
    %4 = vector.load %arg3[%c0_3, %c0_4] : memref<8x16xf32, #tpu.memory_space<vmem>>, vector<8x16xf32>
    %5 = tpu.iota {dimensions = array<i32: 0>} : vector<16x512xi32>
    %6 = tpu.iota {dimensions = array<i32: 1>} : vector<16x512xi32>
    %c32_i32 = arith.constant 32 : i32
    %7 = vector.broadcast %c32_i32 : i32 to vector<16x512xi32>
    %8 = arith.muli %5, %7 : vector<16x512xi32>
    %9 = arith.cmpi sge, %6, %8 : vector<16x512xi32>
    %c32_i32_5 = arith.constant 32 : i32
    %10 = vector.broadcast %c32_i32_5 : i32 to vector<16x512xi32>
    %11 = arith.addi %8, %10 : vector<16x512xi32>
    %12 = arith.cmpi slt, %6, %11 : vector<16x512xi32>
    %13 = arith.andi %9, %12 : vector<16x512xi1>
    %cst = arith.constant 1.000000e+00 : f32
    %cst_6 = arith.constant 0.000000e+00 : f32
    %14 = vector.broadcast %cst : f32 to vector<16x512xf32>
    %15 = vector.broadcast %cst_6 : f32 to vector<16x512xf32>
    %16 = arith.select %13, %14, %15 : vector<16x512xi1>, vector<16x512xf32>
    %cst_7 = arith.constant dense<0.000000e+00> : vector<8x512xf32>
    %17 = tpu.matmul %4, %16, %cst_7 {dimension_numbers = #tpu.dot_dimension_numbers<[1], [0], [0], [1], [0, 0, 1, 1], [], []>} : vector<8x16xf32>, vector<16x512xf32>, vector<8x512xf32> -> vector<8x512xf32>
    %cst_8 = arith.constant dense<0.000000e+00> : vector<8xf32>
    %18 = vector.multi_reduction <add>, %4, %cst_8 [1] : vector<8x16xf32> to vector<8xf32>
    %19 = vector.shape_cast %18 : vector<8xf32> to vector<8x1xf32>
    %cst_9 = arith.constant 3.200000e+01 : f32
    %20 = vector.broadcast %cst_9 : f32 to vector<8x1xf32>
    %21 = arith.mulf %19, %20 : vector<8x1xf32>
    %22 = arith.mulf %3, %17 : vector<8x512xf32>
    %cst_10 = arith.constant dense<0.000000e+00> : vector<8xf32>
    %23 = vector.multi_reduction <add>, %22, %cst_10 [1] : vector<8x512xf32> to vector<8xf32>
    %24 = vector.shape_cast %23 : vector<8xf32> to vector<8x1xf32>
    %25 = arith.divf %24, %21 : vector<8x1xf32>
    %26 = math.sqrt %25 : vector<8x1xf32>
    %c0_11 = arith.constant 0 : index
    %c0_12 = arith.constant 0 : index
    %27 = vector.load %arg4[%c0_11, %c0_12] : memref<8x1xf32, #tpu.memory_space<vmem>>, vector<8x1xf32>
    tpu.vector_store %arg4[%c0_11, %c0_12], %26 {strides = array<i32>} : memref<8x1xf32, #tpu.memory_space<vmem>>, vector<8x1xf32>,
    return
  }
  func.func @transform_0(%arg0: i32) -> (i32, i32) {
    %c0_i32 = arith.constant 0 : i32
    %c0_i32_0 = arith.constant 0 : i32
    return %arg0, %c0_i32 : i32, i32
  }
  func.func @transform_1(%arg0: i32) -> (i32, i32) {
    %c0_i32 = arith.constant 0 : i32
    %c0_i32_0 = arith.constant 0 : i32
    return %arg0, %c0_i32 : i32, i32
  }
  func.func @transform_2(%arg0: i32) -> (i32, i32) {
    %c0_i32 = arith.constant 0 : i32
    %c0_i32_0 = arith.constant 0 : i32
    return %arg0, %c0_i32 : i32, i32
  }
  func.func @transform_3(%arg0: i32) -> (i32, i32) {
    %c0_i32 = arith.constant 0 : i32
    %c0_i32_0 = arith.constant 0 : i32
    return %arg0, %c0_i32 : i32, i32
  }
}

</mosaic_0001>

<llo_original>
// kernel: tpu_custom_call.1
$region0: #{tpu_custom_call.1}
  #allocation0 [shape = 'u32[]', space=smem, size = 0x4, offset = 0x4, fixed_abs, tag = 'smem constant byte address 0x4 - core index']
  #allocation1 [shape = 'u32[144,128]{1,0:T(1,128)}', space=vmem, size = 0x12000, scoped, tag = 'internal scratch']
  %s0 = inlined_call_operand.hbm [shape: f32[24,512], index: 0, kind: input, shape index: {}]
  %s1 = inlined_call_operand.hbm [shape: f32[24,512], index: 1, kind: input, shape index: {}]
  %s2 = inlined_call_operand.vmem [shape: f32[24,16], index: 2, kind: input, shape index: {}]
  %s3 = inlined_call_operand.vmem [shape: f32[24,1], index: 3, kind: output, shape index: {}]
  %s4 = sld [smem:[#allocation0]]
  $region53: #{tpu_custom_call.1} parent=0
    _
  %s6 = ssub.s32 1, %s4
  %s7 = scalar_select 0, %s6, %s4
  $region1: #{tpu_custom_call.1} parent=0
    #allocation2 [shape = 'u8[32768]{0}', space=vmem, size = 0x8000, scoped, tag = 'input window, operand 0']
    #allocation3 [shape = 's32[2]{0}', space=sflag, size = 0x8, scoped, tag = 'scoped memory for tpu_custom_call.1']
    #allocation4 [shape = 'u8[32768]{0}', space=vmem, size = 0x8000, scoped, tag = 'input window, operand 1']
    #allocation5 [shape = 's32[2]{0}', space=sflag, size = 0x8, scoped, tag = 'scoped memory for tpu_custom_call.1']
    %8 = vsyncpa [#allocation3], 0
    %s9 = scalar_lea.sflag [#allocation3], 1
    %10 = vsyncpa %s9, 0
    %11 = vsyncpa [#allocation5], 0
    %s12 = scalar_lea.sflag [#allocation5], 1
    %13 = vsyncpa %s12, 0
    loop: start=0, step=1, limit=5
    $region2: #{tpu_custom_call.1} parent=1 // loop_pre_header
      _
    $region3: #{tpu_custom_call.1} parent=1 // loop_header
      %s15 = sphi 0, %s19
      %p16 = scmp.ge.s32.totalorder %s15, 5
      %s25 = sphi 0, %s27
      %s28 = sphi 0, %s25
      %s29 = sphi 0, %s28
      %s45 = sphi 0, %s29
      %s51 = sphi 0, %s53
      %s54 = sphi 0, %s51
      %s55 = sphi 0, %s54
      %s71 = sphi 0, %s55
      %s77 = sphi 0, %s79
      %s80 = sphi 0, %s77
      %s81 = sphi 0, %s80
      %s97 = sphi 0, %s81
      %s103 = sphi 0, %s105
      %s106 = sphi 0, %s103
      %s107 = sphi 0, %s106
      %s123 = sphi 0, %s107
    $region4: #{tpu_custom_call.1} parent=1 // loop_header_branch
      %18 = sbr.rel (%p16) target = $region8
    $region5: #{tpu_custom_call.1} parent=1 // loop_body
      %s20 = ssub.s32 %s15, 1
      %s21 = ssub.s32 %s15, 2
      %s22 = sadd.s32 %s15, 1
      %s23 = ssub.s32 %s15, %s22
      %p24 = scmp.eq.s32.totalorder %s23, 0
      %s26 = sadd.s32 %s25, 1
      %s27 = scalar_select %p24, %s25, %s26
      %p30 = pneg %p24
      %p31 = scmp.eq.s32.totalorder %s15, 2
      %p32 = por %p30, %p31
      %p33 = scmp.ne.s32.totalorder %s25, %s28
      %p34 = scmp.eq.s32.totalorder %s15, 0
      %p35 = por %p33, %p34
      %p36 = scmp.ne.s32.totalorder %s25, %s28
      %p37 = scmp.eq.s32.totalorder %s20, 2
      %p38 = por %p36, %p37
      %p39 = scmp.ne.s32.totalorder %s28, %s29
      %p40 = scmp.eq.s32.totalorder %s20, 0
      %p41 = por %p39, %p40
      %p42 = scmp.ne.s32.totalorder %s28, %s29
      %p43 = scmp.eq.s32.totalorder %s21, 2
      %p44 = por %p42, %p43
      %p46 = scmp.ne.s32.totalorder %s29, %s45
      %p47 = scmp.eq.s32.totalorder %s21, 0
      %p48 = por %p46, %p47
      %s49 = ssub.s32 %s15, %s22
      %p50 = scmp.eq.s32.totalorder %s49, 0
      %s52 = sadd.s32 %s51, 1
      %s53 = scalar_select %p50, %s51, %s52
      %p56 = pneg %p50
      %p57 = scmp.eq.s32.totalorder %s15, 2
      %p58 = por %p56, %p57
      %p59 = scmp.ne.s32.totalorder %s51, %s54
      %p60 = scmp.eq.s32.totalorder %s15, 0
      %p61 = por %p59, %p60
      %p62 = scmp.ne.s32.totalorder %s51, %s54
      %p63 = scmp.eq.s32.totalorder %s20, 2
      %p64 = por %p62, %p63
      %p65 = scmp.ne.s32.totalorder %s54, %s55
      %p66 = scmp.eq.s32.totalorder %s20, 0
      %p67 = por %p65, %p66
      %p68 = scmp.ne.s32.totalorder %s54, %s55
      %p69 = scmp.eq.s32.totalorder %s21, 2
      %p70 = por %p68, %p69
      %p72 = scmp.ne.s32.totalorder %s55, %s71
      %p73 = scmp.eq.s32.totalorder %s21, 0
      %p74 = por %p72, %p73
      %s75 = ssub.s32 %s15, %s22
      %p76 = scmp.eq.s32.totalorder %s75, 0
      %s78 = sadd.s32 %s77, 1
      %s79 = scalar_select %p76, %s77, %s78
      %p82 = pneg %p76
      %p83 = scmp.eq.s32.totalorder %s15, 2
      %p84 = por %p82, %p83
      %p85 = scmp.ne.s32.totalorder %s77, %s80
      %p86 = scmp.eq.s32.totalorder %s15, 0
      %p87 = por %p85, %p86
      %p88 = scmp.ne.s32.totalorder %s77, %s80
      %p89 = scmp.eq.s32.totalorder %s20, 2
      %p90 = por %p88, %p89
      %p91 = scmp.ne.s32.totalorder %s80, %s81
      %p92 = scmp.eq.s32.totalorder %s20, 0
      %p93 = por %p91, %p92
      %p94 = scmp.ne.s32.totalorder %s80, %s81
      %p95 = scmp.eq.s32.totalorder %s21, 2
      %p96 = por %p94, %p95
      %p98 = scmp.ne.s32.totalorder %s81, %s97
      %p99 = scmp.eq.s32.totalorder %s21, 0
      %p100 = por %p98, %p99
      %s101 = ssub.s32 %s15, %s22
      %p102 = scmp.eq.s32.totalorder %s101, 0
      %s104 = sadd.s32 %s103, 1
      %s105 = scalar_select %p102, %s103, %s104
      %p108 = pneg %p102
      %p109 = scmp.eq.s32.totalorder %s15, 2
      %p110 = por %p108, %p109
      %p111 = scmp.ne.s32.totalorder %s103, %s106
      %p112 = scmp.eq.s32.totalorder %s15, 0
      %p113 = por %p111, %p112
      %p114 = scmp.ne.s32.totalorder %s103, %s106
      %p115 = scmp.eq.s32.totalorder %s20, 2
      %p116 = por %p114, %p115
      %p117 = scmp.ne.s32.totalorder %s106, %s107
      %p118 = scmp.eq.s32.totalorder %s20, 0
      %p119 = por %p117, %p118
      %p120 = scmp.ne.s32.totalorder %s106, %s107
      %p121 = scmp.eq.s32.totalorder %s21, 2
      %p122 = por %p120, %p121
      %p124 = scmp.ne.s32.totalorder %s107, %s123
      %p125 = scmp.eq.s32.totalorder %s21, 0
      %p126 = por %p124, %p125
      %p127 = scmp.le.s32.totalorder 1, %s15
      %p128 = scmp.lt.s32.totalorder %s15, 4
      %p129 = pnand %p127, %p128
      %p130 = pneg %p129
      // Predicated region
      $region9: #{tpu_custom_call.1} parent=5 // pred_check
        _
      $region10: #{tpu_custom_call.1} parent=5 // pred_check_branch
        %132 = sbr.rel (%p129) target = $region12
      $region11: #{tpu_custom_call.1} parent=5 // pred_region
        %s133 = ssub.s32 %s15, 1
      $region12: #{tpu_custom_call.1} parent=5 // pred_fallthru
        _
      %p134 = scmp.lt.s32.totalorder %s15, 3
      // Predicated region
      $region13: #{tpu_custom_call.1} parent=5 // pred_check
        %p135 = pneg %p134
      $region14: #{tpu_custom_call.1} parent=5 // pred_check_branch
        %137 = sbr.rel (%p135) target = $region16
      $region15: #{tpu_custom_call.1} parent=5 // pred_region
        // Predicated region
        $region17: #{tpu_custom_call.1} parent=15 // pred_check
          %p138 = pneg %p35
        $region18: #{tpu_custom_call.1} parent=15 // pred_check_branch
          %140 = sbr.rel (%p138) target = $region20
        $region19: #{tpu_custom_call.1} parent=15 // pred_region
          %s141 = sand.u32 %s25, 1
          %s142 = scalar_lea.sflag [#allocation3], %s141
          %s143 = sand.u32 %s25, 1
          %s144 = smul.addr %s143, 32
          %s145 = scalar_lea.vmem [#allocation2], %s144
          %s147 = ssub.s32 512, 512
          %148 = vsyncadd %s142, %s147
          %s149 = smul.addr %s15, 4
          %s150 = smul.addr %s149, 128
          %s151 = scalar_lea.hbm %s0, %s150
          %s153 = sshll.u32 %s145, 4
          %s154 = int_to_ptr.vmem [resolvable:$true] %s153
          %156 = dma.hbm_to_vmem [thread:$0]  %s151, 512, %s154, %s142
        $region20: #{tpu_custom_call.1} parent=15 // pred_fallthru
          _
        // Predicated region
        $region21: #{tpu_custom_call.1} parent=15 // pred_check
          %p157 = pneg %p61
        $region22: #{tpu_custom_call.1} parent=15 // pred_check_branch
          %159 = sbr.rel (%p157) target = $region24
        $region23: #{tpu_custom_call.1} parent=15 // pred_region
          %s160 = sand.u32 %s51, 1
          %s161 = scalar_lea.sflag [#allocation5], %s160
          %s162 = sand.u32 %s51, 1
          %s163 = smul.addr %s162, 32
          %s164 = scalar_lea.vmem [#allocation4], %s163
          %s166 = ssub.s32 512, 512
          %167 = vsyncadd %s161, %s166
          %s168 = smul.addr %s15, 4
          %s169 = smul.addr %s168, 128
          %s170 = scalar_lea.hbm %s1, %s169
          %s172 = sshll.u32 %s164, 4
          %s173 = int_to_ptr.vmem [resolvable:$true] %s172
          %175 = dma.hbm_to_vmem [thread:$0]  %s170, 512, %s173, %s161
        $region24: #{tpu_custom_call.1} parent=15 // pred_fallthru
          _
        // Predicated region
        $region25: #{tpu_custom_call.1} parent=15 // pred_check
          %p176 = pneg %p87
        $region26: #{tpu_custom_call.1} parent=15 // pred_check_branch
          %178 = sbr.rel (%p176) target = $region28
        $region27: #{tpu_custom_call.1} parent=15 // pred_region
          %p179 = scmp.lt.s32.totalorder %s15, 2
          %s180 = scalar_select %p179, %s15, 2
          %s181 = smul.addr %s180, 8
          %s182 = scalar_lea.vmem %s2, %s181
        $region28: #{tpu_custom_call.1} parent=15 // pred_fallthru
          _
      $region16: #{tpu_custom_call.1} parent=5 // pred_fallthru
        _
      %p183 = scmp.le.s32.totalorder 1, %s15
      %p184 = scmp.lt.s32.totalorder %s15, 4
      %p185 = pnand %p183, %p184
      %p186 = pneg %p185
      // Predicated region
      $region29: #{tpu_custom_call.1} parent=5 // pred_check
        _
      $region30: #{tpu_custom_call.1} parent=5 // pred_check_branch
        %188 = sbr.rel (%p185) target = $region32
      $region31: #{tpu_custom_call.1} parent=5 // pred_region
        %s189 = ssub.s32 %s15, 1
        %s190 = sand.u32 %s28, 1
        %s191 = scalar_lea.sflag [#allocation3], %s190
        %s192 = sand.u32 %s28, 1
        %s193 = smul.addr %s192, 32
        %s194 = scalar_lea.vmem [#allocation2], %s193
        // Predicated region
        $region33: #{tpu_custom_call.1} parent=31 // pred_check
          %p195 = pneg %p41
        $region34: #{tpu_custom_call.1} parent=31 // pred_check_branch
          %197 = sbr.rel (%p195) target = $region36
        $region35: #{tpu_custom_call.1} parent=31 // pred_region
          %198 = dma.done %s191, 512
        $region36: #{tpu_custom_call.1} parent=31 // pred_fallthru
          _
        %s199 = sand.u32 %s54, 1
        %s200 = scalar_lea.sflag [#allocation5], %s199
        %s201 = sand.u32 %s54, 1
        %s202 = smul.addr %s201, 32
        %s203 = scalar_lea.vmem [#allocation4], %s202
        // Predicated region
        $region37: #{tpu_custom_call.1} parent=31 // pred_check
          %p204 = pneg %p67
        $region38: #{tpu_custom_call.1} parent=31 // pred_check_branch
          %206 = sbr.rel (%p204) target = $region40
        $region39: #{tpu_custom_call.1} parent=31 // pred_region
          %207 = dma.done %s200, 512
        $region40: #{tpu_custom_call.1} parent=31 // pred_fallthru
          _
        %s208 = sand.u32 %s28, 1
        %s209 = scalar_lea.sflag [#allocation3], %s208
        %s210 = sand.u32 %s28, 1
        %s211 = smul.addr %s210, 32
        %s212 = scalar_lea.vmem [#allocation2], %s211
        %p213 = pneg %p41
        %p214 = pneg %p38
        %s215 = sand.u32 %s54, 1
        %s216 = scalar_lea.sflag [#allocation5], %s215
        %s217 = sand.u32 %s54, 1
        %s218 = smul.addr %s217, 32
        %s219 = scalar_lea.vmem [#allocation4], %s218
        %p220 = pneg %p67
        %p221 = pneg %p64
        %p222 = scmp.lt.s32.totalorder %s20, 2
        %s223 = scalar_select %p222, %s20, 2
        %s224 = smul.addr %s223, 8
        %s225 = scalar_lea.vmem %s2, %s224
        %p226 = pneg %p93
        %p227 = pneg %p90
        %p228 = pneg %p119
        %p229 = pneg %p116
        %p230 = scmp.lt.s32.totalorder %s20, 2
        %s231 = scalar_select %p230, %s20, 2
        %s232 = smul.addr %s231, 8
        %s233 = scalar_lea.vmem %s3, %s232
        %p234 = scmp.lt.s32.totalorder %s20, 2
        %s235 = scalar_select %p234, %s20, 2
        %s236 = smul.addr %s235, 8
        %s237 = scalar_lea.vmem %s2, %s236
        %p238 = scmp.lt.s32.totalorder %s20, 2
        %s239 = scalar_select %p238, %s20, 2
        %s240 = smul.addr %s239, 8
        %s241 = scalar_lea.vmem %s3, %s240
        %v242 = vld [vmem:[%s194] sm:$0xff]
        %v243 = vld [vmem:[%s194 + $0x8] sm:$0xff]
        %v244 = vld [vmem:[%s194 + $0x10] sm:$0xff]
        %v245 = vld [vmem:[%s194 + $0x18] sm:$0xff]
        %v246 = vld [vmem:[%s203] sm:$0xff]
        %v247 = vld [vmem:[%s203 + $0x8] sm:$0xff]
        %v248 = vld [vmem:[%s203 + $0x10] sm:$0xff]
        %v249 = vld [vmem:[%s203 + $0x18] sm:$0xff]
        %v250 = vsub.f32 %v242, %v246
        %v251 = vsub.f32 %v243, %v247
        %v252 = vsub.f32 %v244, %v248
        %v253 = vsub.f32 %v245, %v249
        %v254 = vmul.f32 %v250, %v250
        %v255 = vmul.f32 %v251, %v251
        %v256 = vmul.f32 %v252, %v252
        %v257 = vmul.f32 %v253, %v253
        %v258 = vld [vmem:[%s237] sm:$0xff]
        %v259 = vlaneseq
        %v260 = vshrl.u32 %v259, 7
        %v261 = vadd.s32 %v260, 8
        %v262 = vlaneseq
        %v263 = vand.u32 %v262, 127
        %v264 = vadd.s32 %v263, 128
        %v265 = vadd.s32 %v263, 256
        %v266 = vadd.s32 %v263, 384
        %v267 = vmul.u32 %v260, 32
        %v268 = vmul.u32 %v261, 32
        %vm269 = vcmp.ge.s32.totalorder %v263, %v267
        %vm270 = vcmp.ge.s32.totalorder %v264, %v267
        %vm271 = vcmp.ge.s32.totalorder %v265, %v267
        %vm272 = vcmp.ge.s32.totalorder %v266, %v267
        %vm273 = vcmp.ge.s32.totalorder %v263, %v268
        %vm274 = vcmp.ge.s32.totalorder %v264, %v268
        %vm275 = vcmp.ge.s32.totalorder %v265, %v268
        %vm276 = vcmp.ge.s32.totalorder %v266, %v268
        %v277 = vadd.s32 %v267, 32
        %v278 = vadd.s32 %v268, 32
        %vm279 = vcmp.lt.s32.totalorder %v263, %v277
        %vm280 = vcmp.lt.s32.totalorder %v264, %v277
        %vm281 = vcmp.lt.s32.totalorder %v265, %v277
        %vm282 = vcmp.lt.s32.totalorder %v266, %v277
        %vm283 = vcmp.lt.s32.totalorder %v263, %v278
        %vm284 = vcmp.lt.s32.totalorder %v264, %v278
        %vm285 = vcmp.lt.s32.totalorder %v265, %v278
        %vm286 = vcmp.lt.s32.totalorder %v266, %v278
        %vm287 = vmand %vm269, %vm279
        %vm288 = vmand %vm270, %vm280
        %vm289 = vmand %vm271, %vm281
        %vm290 = vmand %vm272, %vm282
        %vm291 = vmand %vm273, %vm283
        %vm292 = vmand %vm274, %vm284
        %vm293 = vmand %vm275, %vm285
        %vm294 = vmand %vm276, %vm286
        %v295 = vsel %vm287, 1.0, 0.0
        %v296 = vsel %vm288, 1.0, 0.0
        %v297 = vsel %vm289, 1.0, 0.0
        %v298 = vsel %vm290, 1.0, 0.0
        %v299 = vsel %vm291, 1.0, 0.0
        %v300 = vsel %vm292, 1.0, 0.0
        %v301 = vsel %vm293, 1.0, 0.0
        %v302 = vsel %vm294, 1.0, 0.0
        %vm303 = vcmask 130048
        %v305 = vsel %vm303, %v258, 0
        %307 = vmatprep.subr.mxu0 %v296
        %308 = vmatpush1.msra.mxu0 %v295
        %309 = vmatprep.subr.mxu0 %v300
        %310 = vmatpush1.msra.mxu0 %v299
        %311 = vmatprep.subr.mxu0 0.0
        %312 = vmatpush1.msra.mxu0 0.0
        %313 = vmatprep.subr.mxu0 0.0
        %314 = vmatpush1.msra.mxu0 0.0
        %315 = vmatprep.subr.mxu0 0.0
        %316 = vmatpush1.msra.mxu0 0.0
        %317 = vmatprep.subr.mxu0 0.0
        %318 = vmatpush1.msra.mxu0 0.0
        %319 = vmatprep.subr.mxu0 0.0
        %320 = vmatpush1.msra.mxu0 0.0
        %321 = vmatprep.subr.mxu0 0.0
        %322 = vmatpush1.msra.mxu0 0.0
        %323 = vmatprep.subr.mxu0 0.0
        %324 = vmatpush1.msra.mxu0 0.0
        %325 = vmatprep.subr.mxu0 0.0
        %326 = vmatpush1.msra.mxu0 0.0
        %327 = vmatprep.subr.mxu0 0.0
        %328 = vmatpush1.msra.mxu0 0.0
        %329 = vmatprep.subr.mxu0 0.0
        %330 = vmatpush1.msra.mxu0 0.0
        %331 = vmatprep.subr.mxu0 0.0
        %332 = vmatpush1.msra.mxu0 0.0
        %333 = vmatprep.subr.mxu0 0.0
        %334 = vmatpush1.msra.mxu0 0.0
        %335 = vmatprep.subr.mxu0 0.0
        %336 = vmatpush1.msra.mxu0 0.0
        %337 = vmatprep.subr.mxu0 0.0
        %338 = vmatpush1.msra.mxu0 0.0
        %339 = vmatprep.subr.mxu0 0.0
        %340 = vmatpush1.msra.mxu0 0.0
        %341 = vmatprep.subr.mxu0 0.0
        %342 = vmatpush1.msra.mxu0 0.0
        %343 = vmatprep.subr.mxu0 0.0
        %344 = vmatpush1.msra.mxu0 0.0
        %345 = vmatprep.subr.mxu0 0.0
        %346 = vmatpush1.msra.mxu0 0.0
        %347 = vmatprep.subr.mxu0 0.0
        %348 = vmatpush1.msra.mxu0 0.0
        %349 = vmatprep.subr.mxu0 0.0
        %350 = vmatpush1.msra.mxu0 0.0
        %351 = vmatprep.subr.mxu0 0.0
        %352 = vmatpush1.msra.mxu0 0.0
        %353 = vmatprep.subr.mxu0 0.0
        %354 = vmatpush1.msra.mxu0 0.0
        %355 = vmatprep.subr.mxu0 0.0
        %356 = vmatpush1.msra.mxu0 0.0
        %357 = vmatprep.subr.mxu0 0.0
        %358 = vmatpush1.msra.mxu0 0.0
        %359 = vmatprep.subr.mxu0 0.0
        %360 = vmatpush1.msra.mxu0 0.0
        %361 = vmatprep.subr.mxu0 0.0
        %362 = vmatpush1.msra.mxu0 0.0
        %363 = vmatprep.subr.mxu0 0.0
        %364 = vmatpush1.msra.mxu0 0.0
        %365 = vmatprep.subr.mxu0 0.0
        %366 = vmatpush1.msra.mxu0 0.0
        %367 = vmatprep.subr.mxu0 0.0
        %368 = vmatpush1.msra.mxu0 0.0
        %369 = vmatprep.subr.mxu0 0.0
        %370 = vmatpush1.msra.mxu0 0.0
        %371 = vmatprep.mubr.f32.mxu0 0.0
        %372 = vmatmul.mubr.f32.gmra.mrb[0].mxu0 %v305
        %v373 = vpop.f32.mrb[0].mxu0
        %v374 = vadd.f32 0.0, %v373
        %v375 = vpop.f32.mrb[0].mxu0
        %v376 = vadd.f32 0.0, %v375
        %377 = vdwg.mxu0
        %378 = vmatprep.subr.mxu0 %v298
        %379 = vmatpush1.msra.mxu0 %v297
        %380 = vmatprep.subr.mxu0 %v302
        %381 = vmatpush1.msra.mxu0 %v301
        %382 = vmatprep.subr.mxu0 0.0
        %383 = vmatpush1.msra.mxu0 0.0
        %384 = vmatprep.subr.mxu0 0.0
        %385 = vmatpush1.msra.mxu0 0.0
        %386 = vmatprep.subr.mxu0 0.0
        %387 = vmatpush1.msra.mxu0 0.0
        %388 = vmatprep.subr.mxu0 0.0
        %389 = vmatpush1.msra.mxu0 0.0
        %390 = vmatprep.subr.mxu0 0.0
        %391 = vmatpush1.msra.mxu0 0.0
        %392 = vmatprep.subr.mxu0 0.0
        %393 = vmatpush1.msra.mxu0 0.0
        %394 = vmatprep.subr.mxu0 0.0
        %395 = vmatpush1.msra.mxu0 0.0
        %396 = vmatprep.subr.mxu0 0.0
        %397 = vmatpush1.msra.mxu0 0.0
        %398 = vmatprep.subr.mxu0 0.0
        %399 = vmatpush1.msra.mxu0 0.0
        %400 = vmatprep.subr.mxu0 0.0
        %401 = vmatpush1.msra.mxu0 0.0
        %402 = vmatprep.subr.mxu0 0.0
        %403 = vmatpush1.msra.mxu0 0.0
        %404 = vmatprep.subr.mxu0 0.0
        %405 = vmatpush1.msra.mxu0 0.0
        %406 = vmatprep.subr.mxu0 0.0
        %407 = vmatpush1.msra.mxu0 0.0
        %408 = vmatprep.subr.mxu0 0.0
        %409 = vmatpush1.msra.mxu0 0.0
        %410 = vmatprep.subr.mxu0 0.0
        %411 = vmatpush1.msra.mxu0 0.0
        %412 = vmatprep.subr.mxu0 0.0
        %413 = vmatpush1.msra.mxu0 0.0
        %414 = vmatprep.subr.mxu0 0.0
        %415 = vmatpush1.msra.mxu0 0.0
        %416 = vmatprep.subr.mxu0 0.0
        %417 = vmatpush1.msra.mxu0 0.0
        %418 = vmatprep.subr.mxu0 0.0
        %419 = vmatpush1.msra.mxu0 0.0
        %420 = vmatprep.subr.mxu0 0.0
        %421 = vmatpush1.msra.mxu0 0.0
        %422 = vmatprep.subr.mxu0 0.0
        %423 = vmatpush1.msra.mxu0 0.0
        %424 = vmatprep.subr.mxu0 0.0
        %425 = vmatpush1.msra.mxu0 0.0
        %426 = vmatprep.subr.mxu0 0.0
        %427 = vmatpush1.msra.mxu0 0.0
        %428 = vmatprep.subr.mxu0 0.0
        %429 = vmatpush1.msra.mxu0 0.0
        %430 = vmatprep.subr.mxu0 0.0
        %431 = vmatpush1.msra.mxu0 0.0
        %432 = vmatprep.subr.mxu0 0.0
        %433 = vmatpush1.msra.mxu0 0.0
        %434 = vmatprep.subr.mxu0 0.0
        %435 = vmatpush1.msra.mxu0 0.0
        %436 = vmatprep.subr.mxu0 0.0
        %437 = vmatpush1.msra.mxu0 0.0
        %438 = vmatprep.subr.mxu0 0.0
        %439 = vmatpush1.msra.mxu0 0.0
        %440 = vmatprep.subr.mxu0 0.0
        %441 = vmatpush1.msra.mxu0 0.0
        %442 = vmatprep.mubr.f32.mxu0 0.0
        %443 = vmatmul.mubr.f32.gmra.mrb[0].mxu0 %v305
        %v444 = vpop.f32.mrb[0].mxu0
        %v445 = vadd.f32 0.0, %v444
        %v446 = vpop.f32.mrb[0].mxu0
        %v447 = vadd.f32 0.0, %v446
        %448 = vdwg.mxu0
        %v449 = vsel %vm303, %v258, 0.0
        %450 = vadd.xlane.f32.xlu0 %v449
        %v451 = vpop.xlane.xlu0 %450
        %v452 = vmul.f32 %v451, 32.0
        %v453 = vmul.f32 %v254, %v374
        %v454 = vmul.f32 %v255, %v376
        %v455 = vmul.f32 %v256, %v445
        %v456 = vmul.f32 %v257, %v447
        %v457 = vadd.f32 %v453, %v454
        %v458 = vadd.f32 %v457, %v455
        %v459 = vadd.f32 %v458, %v456
        %460 = vadd.xlane.f32.xlu0 %v459
        %v461 = vpop.xlane.xlu0 %460
        %v462 = vrcp.pop %v452
        %v463 = vmul.f32 %v461, %v462
        %v464 = vrsqrt.pop %v463
        %v465 = vmul.f32 %v463, %v464
        %vm466 = vcmp.eq.f32.partialorder %v463, inf
        %v467 = vsel %vm466, %v463, %v465
        %vm468 = vcmp.eq.f32.partialorder %v463, 0.0
        %v469 = vand.u32 %v463, 2147483648
        %v470 = vsel %vm468, %v469, %v467
        %vm471 = vcmask 7168
        %472 = vst.msk [vmem:[%s241] sm:$0xff] %vm471, %v470
        %p473 = scmp.lt.s32.totalorder %s20, 2
        %s474 = scalar_select %p473, %s20, 2
        %s475 = smul.addr %s474, 8
        %s476 = scalar_lea.vmem %s3, %s475
        // Predicated region
        $region41: #{tpu_custom_call.1} parent=31 // pred_check
          %p477 = pneg %p116
        $region42: #{tpu_custom_call.1} parent=31 // pred_check_branch
          %479 = sbr.rel (%p477) target = $region44
        $region43: #{tpu_custom_call.1} parent=31 // pred_region
          _
        $region44: #{tpu_custom_call.1} parent=31 // pred_fallthru
          _
      $region32: #{tpu_custom_call.1} parent=5 // pred_fallthru
        _
      %p480 = scmp.le.s32.totalorder 2, %s15
      // Predicated region
      $region45: #{tpu_custom_call.1} parent=5 // pred_check
        %p481 = pneg %p480
      $region46: #{tpu_custom_call.1} parent=5 // pred_check_branch
        %483 = sbr.rel (%p481) target = $region48
      $region47: #{tpu_custom_call.1} parent=5 // pred_region
        %s484 = ssub.s32 %s15, 2
        // Predicated region
        $region49: #{tpu_custom_call.1} parent=47 // pred_check
          %p485 = pneg %p122
        $region50: #{tpu_custom_call.1} parent=47 // pred_check_branch
          %487 = sbr.rel (%p485) target = $region52
        $region51: #{tpu_custom_call.1} parent=47 // pred_region
          %p488 = scmp.lt.s32.totalorder %s21, 2
          %s489 = scalar_select %p488, %s21, 2
          %s490 = smul.addr %s489, 8
          %s491 = scalar_lea.vmem %s3, %s490
        $region52: #{tpu_custom_call.1} parent=47 // pred_fallthru
          _
      $region48: #{tpu_custom_call.1} parent=5 // pred_fallthru
        _
    $region6: #{tpu_custom_call.1} parent=1 // loop_footer
      %s19 = sadd.s32 1, %s15
    $region7: #{tpu_custom_call.1} parent=1 // loop_footer_branch
      %14 = sbr.rel target = $region3
    $region8: #{tpu_custom_call.1} parent=1 // loop_exit
      _
    %492 = vsyncpa [#allocation3], 1
    %s493 = scalar_lea.sflag [#allocation3], 1
    %494 = vsyncpa %s493, 1
    %495 = vsyncpa [#allocation5], 1
    %s496 = scalar_lea.sflag [#allocation5], 1
    %497 = vsyncpa %s496, 1

</llo_original>
